<compile_context>
chip_gen: v7x
topology: tpu7x:2x2x1
jax: 0.10.0
libtpu: 0.0.40
codegen_flags: <defaults>
</compile_context>

<pallas_src>
import jax
import jax.numpy as jnp
from jax.experimental import pallas as pl
from jax.experimental.pallas import tpu as pltpu


def _round_up(x, m):
    return ((x + m - 1) // m) * m


def _cdiv(a, b):
    return (a + b - 1) // b


def _reward_net_kernel(x_ref, w1_ref, b1_ref, w2_ref, b2_ref, w3_ref, b3_ref, o_ref):
    # MXU inputs in bf16 (full rate on v5e/v6e/v7x); accumulation and all elementwise work in f32
    # (v5e has no bf16 VALU/EUP). Casts are in-kernel VPU ops -> no separate XLA astype pass.
    x = x_ref[...].astype(jnp.bfloat16)                                   # (tb, d_in)

    z1 = jnp.dot(x, w1_ref[...].astype(jnp.bfloat16),
                 preferred_element_type=jnp.float32)                      # (tb, l1) f32 acc
    z1 = jnp.maximum(z1 + b1_ref[...], 0.0)                               # bias + ReLU, f32 VPU

    z2 = jnp.dot(z1.astype(jnp.bfloat16), w2_ref[...].astype(jnp.bfloat16),
                 preferred_element_type=jnp.float32)                      # (tb, l2)
    z2 = jnp.maximum(z2 + b2_ref[...], 0.0)

    z3 = jnp.dot(z2.astype(jnp.bfloat16), w3_ref[...].astype(jnp.bfloat16),
                 preferred_element_type=jnp.float32)                      # (tb, n_agent)
    z3 = z3 + b3_ref[...]

    # sigmoid(z) = 0.5 * (1 + tanh(0.5 z)): one EUP op per element, numerically exact.
    o_ref[...] = (0.5 * (1.0 + jnp.tanh(0.5 * z3))).astype(o_ref.dtype)


def _choose_batch_tile(B, tile_b, split_min=512):
    """Whole (16-rounded) batch in one grid step when small; otherwise up to tile_b rows/step.
    Once the batch is big enough to amortize the ~0.35 us per-step overhead, force >= 2 steps so
    the 'parallel' batch axis can shard across both TensorCores on v7x."""
    if B <= split_min:
        return min(tile_b, _round_up(B, 16))
    if B <= 2 * tile_b:
        return _round_up(_cdiv(B, 2), 16)     # ~2 grid steps
    return tile_b


def reward_net_forward(x, params, *, tile_b=1024):
    """x: [B, input_size] f32; params: f32 dict w1,b1,w2,b2,w3,b3 (w: [in, out], b: [1, out])."""
    w1, b1 = params["w1"], params["b1"]
    w2, b2 = params["w2"], params["b2"]
    w3, b3 = params["w3"], params["b3"]

    B, d_in = x.shape
    l1 = w1.shape[1]
    l2 = w2.shape[1]
    n_agent = w3.shape[1]

    tb = _choose_batch_tile(B, tile_b)
    grid = (_cdiv(B, tb),)   # ragged last block: Pallas pads reads, drops out-of-bounds writes

    in_specs = [
        pl.BlockSpec((tb, d_in), lambda i: (i, 0)),      # x tile (batch-tiled)
        pl.BlockSpec((d_in, l1), lambda i: (0, 0)),      # w1 (resident; constant index_map)
        pl.BlockSpec((1, l1), lambda i: (0, 0)),         # b1
        pl.BlockSpec((l1, l2), lambda i: (0, 0)),        # w2
        pl.BlockSpec((1, l2), lambda i: (0, 0)),         # b2
        pl.BlockSpec((l2, n_agent), lambda i: (0, 0)),   # w3 (narrow: no lane padding)
        pl.BlockSpec((1, n_agent), lambda i: (0, 0)),    # b3
    ]
    out_spec = pl.BlockSpec((tb, n_agent), lambda i: (i, 0))

    n_param = d_in * l1 + l1 * l2 + l2 * n_agent + l1 + l2 + n_agent
    cost = pl.CostEstimate(
        flops=2 * B * (d_in * l1 + l1 * l2 + l2 * n_agent),
        transcendentals=B * n_agent,                              # one tanh per output element
        bytes_accessed=B * d_in * 4 + n_param * 4 + B * n_agent * 4,
    )

    return pl.pallas_call(
        _reward_net_kernel,
        out_shape=jax.ShapeDtypeStruct((B, n_agent), jnp.float32),
        grid_spec=pltpu.PrefetchScalarGridSpec(
            num_scalar_prefetch=0,
            grid=grid,
            in_specs=in_specs,
            out_specs=out_spec,
        ),
        compiler_params=pltpu.CompilerParams(
            dimension_semantics=("parallel",),   # batch axis shards across TCs on v7x
        ),
        cost_estimate=cost,
    )(x, w1, b1, w2, b2, w3, b3)


def init_reward_net_params(key, l_obs, l_act, n_agent, l1=64, l2=64):
    """Deterministic init mimicking nn.Linear default (uniform +/- 1/sqrt(fan_in)); f32 params."""
    input_size = l_obs + l_act * (n_agent - 1)
    ks = jax.random.split(key, 6)

    def lin(kw, kb, fan_in, fan_out):
        bound = 1.0 / jnp.sqrt(float(fan_in))
        w = jax.random.uniform(kw, (fan_in, fan_out), jnp.float32, -bound, bound)
        b = jax.random.uniform(kb, (1, fan_out), jnp.float32, -bound, bound)
        return w, b

    w1, b1 = lin(ks[0], ks[1], input_size, l1)
    w2, b2 = lin(ks[2], ks[3], l1, l2)
    w3, b3 = lin(ks[4], ks[5], l2, n_agent)
    return {"w1": w1, "b1": b1, "w2": w2, "b2": b2, "w3": w3, "b3": b3}


def reward_net_reference_f32(x, p):
    """Pure-f32 reference (matches the PyTorch module semantics)."""
    z1 = jax.nn.relu(x @ p["w1"] + p["b1"])
    z2 = jax.nn.relu(z1 @ p["w2"] + p["b2"])
    return jax.nn.sigmoid(z2 @ p["w3"] + p["b3"])


def reward_net_reference_bf16(x, p):
    """Reference mirroring the kernel's mixed precision (bf16 MXU inputs, f32 accumulation)."""
    xb = x.astype(jnp.bfloat16)
    w1 = p["w1"].astype(jnp.bfloat16)
    w2 = p["w2"].astype(jnp.bfloat16)
    w3 = p["w3"].astype(jnp.bfloat16)
    z1 = jnp.maximum(jnp.dot(xb, w1, preferred_element_type=jnp.float32) + p["b1"], 0.0)
    z2 = jnp.maximum(jnp.dot(z1.astype(jnp.bfloat16), w2,
                             preferred_element_type=jnp.float32) + p["b2"], 0.0)
    z3 = jnp.dot(z2.astype(jnp.bfloat16), w3, preferred_element_type=jnp.float32) + p["b3"]
    return jax.nn.sigmoid(z3)


if __name__ == "__main__":
    # Module-consistent toy shapes: l_obs=16, l_act=4, n_agent=3
    #   -> input_size = 16 + 4*(3-1) = 24; hidden l1=l2=64; batch=16 (one grid step, no padding).
    l_obs, l_act, n_agent = 16, 4, 3
    batch = 16
    input_size = l_obs + l_act * (n_agent - 1)

    key = jax.random.PRNGKey(0)
    k_x, k_p, k_x2 = jax.random.split(key, 3)
    x = jax.random.normal(k_x, (batch, input_size), jnp.float32)
    params = init_reward_net_params(k_p, l_obs, l_act, n_agent)

    out = jax.block_until_ready(reward_net_forward(x, params))
    assert out.shape == (batch, n_agent)

    # Tight check against a reference mirroring the kernel's mixed precision.
    ref_bf16 = reward_net_reference_bf16(x, params)
    assert jnp.allclose(out, ref_bf16, atol=2e-3, rtol=2e-3), "mismatch vs bf16-mirrored reference"

    # Looser semantic check against the pure-f32 PyTorch-equivalent forward.
    ref_f32 = reward_net_reference_f32(x, params)
    assert jnp.allclose(out, ref_f32, atol=5e-2, rtol=5e-2), "mismatch vs f32 reference"

    # Ragged batch (B not a multiple of the tile) exercises the cdiv grid / masked boundary block.
    x2 = jax.random.normal(k_x2, (40, input_size), jnp.float32)
    out2 = jax.block_until_ready(reward_net_forward(x2, params, tile_b=16))
    assert out2.shape == (40, n_agent)
    assert jnp.allclose(out2, reward_net_reference_bf16(x2, params), atol=2e-3, rtol=2e-3), \
        "mismatch on ragged batch"

    print("KERNEL_OK")
</pallas_src>

<mosaic_0001>
module attributes {stable_mosaic.version = 11 : i64} {
  func.func @_reward_net_kernel(%arg0: i32, %arg1: memref<16x24xf32, #tpu.memory_space<vmem>>, %arg2: memref<24x64xf32, #tpu.memory_space<vmem>>, %arg3: memref<1x64xf32, #tpu.memory_space<vmem>>, %arg4: memref<64x64xf32, #tpu.memory_space<vmem>>, %arg5: memref<1x64xf32, #tpu.memory_space<vmem>>, %arg6: memref<64x3xf32, #tpu.memory_space<vmem>>, %arg7: memref<1x3xf32, #tpu.memory_space<vmem>>, %arg8: memref<16x3xf32, #tpu.memory_space<vmem>>) attributes {dimension_semantics = [#tpu.dimension_semantics<parallel>], iteration_bounds = array<i64: 1>, scalar_prefetch = 0 : i64, scratch_operands = 0 : i64, tpu.core_type = #tpu.core_type<tc>, window_params = [{transform_indices = @transform_0, window_bounds = array<i64: 16, 24>}, {pipeline_mode = #tpu.pipeline_mode<synchronous>, transform_indices = @transform_1, window_bounds = array<i64: 24, 64>}, {pipeline_mode = #tpu.pipeline_mode<synchronous>, transform_indices = @transform_2, window_bounds = array<i64: 1, 64>}, {pipeline_mode = #tpu.pipeline_mode<synchronous>, transform_indices = @transform_3, window_bounds = array<i64: 64, 64>}, {pipeline_mode = #tpu.pipeline_mode<synchronous>, transform_indices = @transform_4, window_bounds = array<i64: 1, 64>}, {pipeline_mode = #tpu.pipeline_mode<synchronous>, transform_indices = @transform_5, window_bounds = array<i64: 64, 3>}, {pipeline_mode = #tpu.pipeline_mode<synchronous>, transform_indices = @transform_6, window_bounds = array<i64: 1, 3>}, {transform_indices = @transform_7, window_bounds = array<i64: 16, 3>}]} {
    %c0 = arith.constant 0 : index
    %c0_0 = arith.constant 0 : index
    %0 = vector.load %arg1[%c0, %c0_0] : memref<16x24xf32, #tpu.memory_space<vmem>>, vector<16x24xf32>
    %1 = arith.truncf %0 : vector<16x24xf32> to vector<16x24xbf16>
    %c0_1 = arith.constant 0 : index
    %c0_2 = arith.constant 0 : index
    %2 = vector.load %arg2[%c0_1, %c0_2] : memref<24x64xf32, #tpu.memory_space<vmem>>, vector<24x64xf32>
    %3 = arith.truncf %2 : vector<24x64xf32> to vector<24x64xbf16>
    %cst = arith.constant dense<0.000000e+00> : vector<16x64xf32>
    %4 = tpu.matmul %1, %3, %cst {dimension_numbers = #tpu.dot_dimension_numbers<[1], [0], [0], [1], [0, 0, 1, 1], [], []>} : vector<16x24xbf16>, vector<24x64xbf16>, vector<16x64xf32> -> vector<16x64xf32>
    %c0_3 = arith.constant 0 : index
    %c0_4 = arith.constant 0 : index
    %5 = vector.load %arg3[%c0_3, %c0_4] : memref<1x64xf32, #tpu.memory_space<vmem>>, vector<1x64xf32>
    %6 = vector.broadcast %5 : vector<1x64xf32> to vector<16x64xf32>
    %7 = arith.addf %4, %6 : vector<16x64xf32>
    %cst_5 = arith.constant 0.000000e+00 : f32
    %8 = vector.broadcast %cst_5 : f32 to vector<16x64xf32>
    %9 = arith.maximumf %7, %8 : vector<16x64xf32>
    %10 = arith.truncf %9 : vector<16x64xf32> to vector<16x64xbf16>
    %c0_6 = arith.constant 0 : index
    %c0_7 = arith.constant 0 : index
    %11 = vector.load %arg4[%c0_6, %c0_7] : memref<64x64xf32, #tpu.memory_space<vmem>>, vector<64x64xf32>
    %12 = arith.truncf %11 : vector<64x64xf32> to vector<64x64xbf16>
    %cst_8 = arith.constant dense<0.000000e+00> : vector<16x64xf32>
    %13 = tpu.matmul %10, %12, %cst_8 {dimension_numbers = #tpu.dot_dimension_numbers<[1], [0], [0], [1], [0, 0, 1, 1], [], []>} : vector<16x64xbf16>, vector<64x64xbf16>, vector<16x64xf32> -> vector<16x64xf32>
    %c0_9 = arith.constant 0 : index
    %c0_10 = arith.constant 0 : index
    %14 = vector.load %arg5[%c0_9, %c0_10] : memref<1x64xf32, #tpu.memory_space<vmem>>, vector<1x64xf32>
    %15 = vector.broadcast %14 : vector<1x64xf32> to vector<16x64xf32>
    %16 = arith.addf %13, %15 : vector<16x64xf32>
    %cst_11 = arith.constant 0.000000e+00 : f32
    %17 = vector.broadcast %cst_11 : f32 to vector<16x64xf32>
    %18 = arith.maximumf %16, %17 : vector<16x64xf32>
    %19 = arith.truncf %18 : vector<16x64xf32> to vector<16x64xbf16>
    %c0_12 = arith.constant 0 : index
    %c0_13 = arith.constant 0 : index
    %20 = vector.load %arg6[%c0_12, %c0_13] : memref<64x3xf32, #tpu.memory_space<vmem>>, vector<64x3xf32>
    %21 = arith.truncf %20 : vector<64x3xf32> to vector<64x3xbf16>
    %cst_14 = arith.constant dense<0.000000e+00> : vector<16x3xf32>
    %22 = tpu.matmul %19, %21, %cst_14 {dimension_numbers = #tpu.dot_dimension_numbers<[1], [0], [0], [1], [0, 0, 1, 1], [], []>} : vector<16x64xbf16>, vector<64x3xbf16>, vector<16x3xf32> -> vector<16x3xf32>
    %c0_15 = arith.constant 0 : index
    %c0_16 = arith.constant 0 : index
    %23 = vector.load %arg7[%c0_15, %c0_16] : memref<1x3xf32, #tpu.memory_space<vmem>>, vector<1x3xf32>
    %24 = vector.broadcast %23 : vector<1x3xf32> to vector<16x3xf32>
    %25 = arith.addf %22, %24 : vector<16x3xf32>
    %cst_17 = arith.constant 5.000000e-01 : f32
    %26 = vector.broadcast %cst_17 : f32 to vector<16x3xf32>
    %27 = arith.mulf %26, %25 : vector<16x3xf32>
    %28 = math.tanh %27 : vector<16x3xf32>
    %cst_18 = arith.constant 1.000000e+00 : f32
    %29 = vector.broadcast %cst_18 : f32 to vector<16x3xf32>
    %30 = arith.addf %29, %28 : vector<16x3xf32>
    %cst_19 = arith.constant 5.000000e-01 : f32
    %31 = vector.broadcast %cst_19 : f32 to vector<16x3xf32>
    %32 = arith.mulf %31, %30 : vector<16x3xf32>
    %c0_20 = arith.constant 0 : index
    %c0_21 = arith.constant 0 : index
    %33 = vector.load %arg8[%c0_20, %c0_21] : memref<16x3xf32, #tpu.memory_space<vmem>>, vector<16x3xf32>
    tpu.vector_store %arg8[%c0_20, %c0_21], %32 {strides = array<i32>} : memref<16x3xf32, #tpu.memory_space<vmem>>, vector<16x3xf32>,
    return
  }
  func.func @transform_0(%arg0: i32) -> (i32, i32) {
    %c0_i32 = arith.constant 0 : i32
    %c0_i32_0 = arith.constant 0 : i32
    return %arg0, %c0_i32 : i32, i32
  }
  func.func @transform_1(%arg0: i32) -> (i32, i32) {
    %c0_i32 = arith.constant 0 : i32
    %c0_i32_0 = arith.constant 0 : i32
    %c0_i32_1 = arith.constant 0 : i32
    return %c0_i32, %c0_i32_0 : i32, i32
  }
  func.func @transform_2(%arg0: i32) -> (i32, i32) {
    %c0_i32 = arith.constant 0 : i32
    %c0_i32_0 = arith.constant 0 : i32
    %c0_i32_1 = arith.constant 0 : i32
    return %c0_i32, %c0_i32_0 : i32, i32
  }
  func.func @transform_3(%arg0: i32) -> (i32, i32) {
    %c0_i32 = arith.constant 0 : i32
    %c0_i32_0 = arith.constant 0 : i32
    %c0_i32_1 = arith.constant 0 : i32
    return %c0_i32, %c0_i32_0 : i32, i32
  }
  func.func @transform_4(%arg0: i32) -> (i32, i32) {
    %c0_i32 = arith.constant 0 : i32
    %c0_i32_0 = arith.constant 0 : i32
    %c0_i32_1 = arith.constant 0 : i32
    return %c0_i32, %c0_i32_0 : i32, i32
  }
  func.func @transform_5(%arg0: i32) -> (i32, i32) {
    %c0_i32 = arith.constant 0 : i32
    %c0_i32_0 = arith.constant 0 : i32
    %c0_i32_1 = arith.constant 0 : i32
    return %c0_i32, %c0_i32_0 : i32, i32
  }
  func.func @transform_6(%arg0: i32) -> (i32, i32) {
    %c0_i32 = arith.constant 0 : i32
    %c0_i32_0 = arith.constant 0 : i32
    %c0_i32_1 = arith.constant 0 : i32
    return %c0_i32, %c0_i32_0 : i32, i32
  }
  func.func @transform_7(%arg0: i32) -> (i32, i32) {
    %c0_i32 = arith.constant 0 : i32
    %c0_i32_0 = arith.constant 0 : i32
    return %arg0, %c0_i32 : i32, i32
  }
}

</mosaic_0001>

<llo_original>
// kernel: tpu_custom_call.1
$region0: #{tpu_custom_call.1}
  #allocation0 [shape = 'u32[]', space=smem, size = 0x4, offset = 0x4, fixed_abs, tag = 'smem constant byte address 0x4 - core index']
  #allocation1 [shape = 'u32[144,128]{1,0:T(1,128)}', space=vmem, size = 0x12000, scoped, tag = 'internal scratch']
  %s0 = inlined_call_operand.hbm [shape: f32[16,24], index: 0, kind: input, shape index: {}]
  %s1 = inlined_call_operand.hbm [shape: f32[24,64], index: 1, kind: input, shape index: {}]
  %s2 = inlined_call_operand.vmem [shape: f32[1,64], index: 2, kind: input, shape index: {}]
  %s3 = inlined_call_operand.vmem [shape: f32[64,64], index: 3, kind: input, shape index: {}]
  %s4 = inlined_call_operand.vmem [shape: f32[1,64], index: 4, kind: input, shape index: {}]
  %s5 = inlined_call_operand.vmem [shape: f32[64,3], index: 5, kind: input, shape index: {}]
  %s6 = inlined_call_operand.vmem [shape: f32[1,3], index: 6, kind: input, shape index: {}]
  %s7 = inlined_call_operand.vmem [shape: f32[16,3], index: 7, kind: output, shape index: {}]
  %s8 = sld [smem:[#allocation0]]
  $region46: #{tpu_custom_call.1} parent=0
    _
  %s10 = ssub.s32 1, %s8
  %s11 = scalar_select 0, %s10, %s8
  $region1: #{tpu_custom_call.1} parent=0
    #allocation2 [shape = 'u8[8192]{0}', space=vmem, size = 0x2000, scoped, tag = 'input window, operand 0, single buffered']
    #allocation3 [shape = 's32[1]{0}', space=sflag, size = 0x4, scoped, tag = 'scoped memory for tpu_custom_call.1']
    #allocation4 [shape = 'u8[12288]{0}', space=vmem, size = 0x3000, scoped, tag = 'input window, operand 1, single buffered']
    #allocation5 [shape = 's32[1]{0}', space=sflag, size = 0x4, scoped, tag = 'scoped memory for tpu_custom_call.1']
    %12 = vsyncpa [#allocation3], 0
    %13 = vsyncpa [#allocation5], 0
    // Predicated region
    $region2: #{tpu_custom_call.1} parent=1 // pred_check
      _
    $region3: #{tpu_custom_call.1} parent=1 // pred_check_branch
      %15 = sbr.rel (0) target = $region5
    $region4: #{tpu_custom_call.1} parent=1 // pred_region
      %s17 = ssub.s32 256, 256
      %18 = vsyncadd [#allocation3], %s17
      %s19 = sshll.u32 [#allocation2], 4
      %s20 = int_to_ptr.vmem [resolvable:$true] %s19
      %25 = dma.hbm_to_vmem [thread:$0]  %s0, 256, %s20, [#allocation3], 128, 128, 8
    $region5: #{tpu_custom_call.1} parent=1 // pred_fallthru
      _
    // Predicated region
    $region6: #{tpu_custom_call.1} parent=1 // pred_check
      _
    $region7: #{tpu_custom_call.1} parent=1 // pred_check_branch
      %27 = sbr.rel (0) target = $region9
    $region8: #{tpu_custom_call.1} parent=1 // pred_region
      %s29 = ssub.s32 384, 384
      %30 = vsyncadd [#allocation5], %s29
      %s31 = sshll.u32 [#allocation4], 4
      %s32 = int_to_ptr.vmem [resolvable:$true] %s31
      %37 = dma.hbm_to_vmem [thread:$0]  %s1, 384, %s32, [#allocation5], 128, 128, 8
    $region9: #{tpu_custom_call.1} parent=1 // pred_fallthru
      _
    // Predicated region
    $region10: #{tpu_custom_call.1} parent=1 // pred_check
      _
    $region11: #{tpu_custom_call.1} parent=1 // pred_check_branch
      %39 = sbr.rel (0) target = $region13
    $region12: #{tpu_custom_call.1} parent=1 // pred_region
      _
    $region13: #{tpu_custom_call.1} parent=1 // pred_fallthru
      _
    // Predicated region
    $region14: #{tpu_custom_call.1} parent=1 // pred_check
      _
    $region15: #{tpu_custom_call.1} parent=1 // pred_check_branch
      %41 = sbr.rel (0) target = $region17
    $region16: #{tpu_custom_call.1} parent=1 // pred_region
      _
    $region17: #{tpu_custom_call.1} parent=1 // pred_fallthru
      _
    // Predicated region
    $region18: #{tpu_custom_call.1} parent=1 // pred_check
      _
    $region19: #{tpu_custom_call.1} parent=1 // pred_check_branch
      %43 = sbr.rel (0) target = $region21
    $region20: #{tpu_custom_call.1} parent=1 // pred_region
      _
    $region21: #{tpu_custom_call.1} parent=1 // pred_fallthru
      _
    // Predicated region
    $region22: #{tpu_custom_call.1} parent=1 // pred_check
      _
    $region23: #{tpu_custom_call.1} parent=1 // pred_check_branch
      %45 = sbr.rel (0) target = $region25
    $region24: #{tpu_custom_call.1} parent=1 // pred_region
      _
    $region25: #{tpu_custom_call.1} parent=1 // pred_fallthru
      _
    // Predicated region
    $region26: #{tpu_custom_call.1} parent=1 // pred_check
      _
    $region27: #{tpu_custom_call.1} parent=1 // pred_check_branch
      %47 = sbr.rel (0) target = $region29
    $region28: #{tpu_custom_call.1} parent=1 // pred_region
      _
    $region29: #{tpu_custom_call.1} parent=1 // pred_fallthru
      _
    // Predicated region
    $region30: #{tpu_custom_call.1} parent=1 // pred_check
      _
    $region31: #{tpu_custom_call.1} parent=1 // pred_check_branch
      %49 = sbr.rel (0) target = $region33
    $region32: #{tpu_custom_call.1} parent=1 // pred_region
      %50 = dma.done [#allocation3], 256
    $region33: #{tpu_custom_call.1} parent=1 // pred_fallthru
      _
    // Predicated region
    $region34: #{tpu_custom_call.1} parent=1 // pred_check
      _
    $region35: #{tpu_custom_call.1} parent=1 // pred_check_branch
      %52 = sbr.rel (0) target = $region37
    $region36: #{tpu_custom_call.1} parent=1 // pred_region
      %53 = dma.done [#allocation5], 384
    $region37: #{tpu_custom_call.1} parent=1 // pred_fallthru
      _
    %v55 = vld [vmem:[#allocation2] sm:$0xff]
    %v56 = vld [vmem:[#allocation2 + $0x8] sm:$0xff]
    %v57 = vpack.c.bf16 %v56, %v55
    %v58 = vld [vmem:[#allocation4] sm:$0xff]
    %v59 = vld [vmem:[#allocation4 + $0x8] sm:$0xff]
    %v60 = vld [vmem:[#allocation4 + $0x10] sm:$0xff]
    %v61 = vpack.c.bf16 %v59, %v58
    %v62 = vpack.c.bf16 %v60, %v60
    %v63 = vld [vmem:[%s2] sm:$0x1]
    %v65 = vlaneseq
    %v66 = vshrl.u32 %v65, 7
    %v67 = vsub.s32 0, %v66
    %v68 = vrot.slane %v63, %v67
    %vm70 = vcmask 195584
    %v72 = vsel %vm70, %v57, 0
    %vm74 = vcmask 1043456
    %v76 = vsel %vm74, %v62, 0
    %78 = vmatprep.subr.bf16.mxu0 0
    %79 = vmatpush1.bf16.msra.mxu0 %v61
    %80 = vmatprep.subr.bf16.mxu0 0
    %81 = vmatpush1.bf16.msra.mxu0 %v76
    %82 = vmatprep.subr.bf16.mxu0 0
    %83 = vmatpush1.bf16.msra.mxu0 0
    %84 = vmatprep.subr.bf16.mxu0 0
    %85 = vmatpush1.bf16.msra.mxu0 0
    %86 = vmatprep.subr.bf16.mxu0 0
    %87 = vmatpush1.bf16.msra.mxu0 0
    %88 = vmatprep.subr.bf16.mxu0 0
    %89 = vmatpush1.bf16.msra.mxu0 0
    %90 = vmatprep.subr.bf16.mxu0 0
    %91 = vmatpush1.bf16.msra.mxu0 0
    %92 = vmatprep.subr.bf16.mxu0 0
    %93 = vmatpush1.bf16.msra.mxu0 0
    %94 = vmatprep.subr.bf16.mxu0 0
    %95 = vmatpush1.bf16.msra.mxu0 0
    %96 = vmatprep.subr.bf16.mxu0 0
    %97 = vmatpush1.bf16.msra.mxu0 0
    %98 = vmatprep.subr.bf16.mxu0 0
    %99 = vmatpush1.bf16.msra.mxu0 0
    %100 = vmatprep.subr.bf16.mxu0 0
    %101 = vmatpush1.bf16.msra.mxu0 0
    %102 = vmatprep.subr.bf16.mxu0 0
    %103 = vmatpush1.bf16.msra.mxu0 0
    %104 = vmatprep.subr.bf16.mxu0 0
    %105 = vmatpush1.bf16.msra.mxu0 0
    %106 = vmatprep.subr.bf16.mxu0 0
    %107 = vmatpush1.bf16.msra.mxu0 0
    %108 = vmatprep.subr.bf16.mxu0 0
    %109 = vmatpush1.bf16.msra.mxu0 0
    %110 = vmatprep.mubr.bf16.mxu0 0
    %111 = vmatmul.mubr.bf16.gmra.mrb[0].mxu0 %v72
    %v112 = vpop.f32.mrb[0].mxu0
    %v113 = vadd.f32 %v68, %v112
    %v114 = vpop.f32.mrb[0].mxu0
    %v115 = vpop.f32.mrb[0].mxu0
    %v116 = vadd.f32 %v68, %v115
    %v117 = vpop.f32.mrb[0].mxu0
    %118 = vdwg.mxu0
    %v119 = vmax.f32 %v113, 0.0
    %v120 = vmax.f32 %v116, 0.0
    %v121 = vpack.c.bf16 %v120, %v119
    %v122 = vld [vmem:[%s3] sm:$0xff]
    %v123 = vld [vmem:[%s3 + $0x8] sm:$0xff]
    %v124 = vld [vmem:[%s3 + $0x10] sm:$0xff]
    %v125 = vld [vmem:[%s3 + $0x18] sm:$0xff]
    %v126 = vld [vmem:[%s3 + $0x20] sm:$0xff]
    %v127 = vld [vmem:[%s3 + $0x28] sm:$0xff]
    %v128 = vld [vmem:[%s3 + $0x30] sm:$0xff]
    %v129 = vld [vmem:[%s3 + $0x38] sm:$0xff]
    %v130 = vpack.c.bf16 %v123, %v122
    %v131 = vpack.c.bf16 %v125, %v124
    %v132 = vpack.c.bf16 %v127, %v126
    %v133 = vpack.c.bf16 %v129, %v128
    %v134 = vld [vmem:[%s4] sm:$0x1]
    %v136 = vlaneseq
    %v137 = vshrl.u32 %v136, 7
    %v138 = vsub.s32 0, %v137
    %v139 = vrot.slane %v134, %v138
    %vm141 = vcmask 523264
    %v143 = vsel %vm141, %v121, 0
    %145 = vmatprep.subr.bf16.mxu0 0
    %146 = vmatpush1.bf16.msra.mxu0 %v130
    %147 = vmatprep.subr.bf16.mxu0 0
    %148 = vmatpush1.bf16.msra.mxu0 %v131
    %149 = vmatprep.subr.bf16.mxu0 0
    %150 = vmatpush1.bf16.msra.mxu0 %v132
    %151 = vmatprep.subr.bf16.mxu0 0
    %152 = vmatpush1.bf16.msra.mxu0 %v133
    %153 = vmatprep.subr.bf16.mxu0 0
    %154 = vmatpush1.bf16.msra.mxu0 0
    %155 = vmatprep.subr.bf16.mxu0 0
    %156 = vmatpush1.bf16.msra.mxu0 0
    %157 = vmatprep.subr.bf16.mxu0 0
    %158 = vmatpush1.bf16.msra.mxu0 0
    %159 = vmatprep.subr.bf16.mxu0 0
    %160 = vmatpush1.bf16.msra.mxu0 0
    %161 = vmatprep.subr.bf16.mxu0 0
    %162 = vmatpush1.bf16.msra.mxu0 0
    %163 = vmatprep.subr.bf16.mxu0 0
    %164 = vmatpush1.bf16.msra.mxu0 0
    %165 = vmatprep.subr.bf16.mxu0 0
    %166 = vmatpush1.bf16.msra.mxu0 0
    %167 = vmatprep.subr.bf16.mxu0 0
    %168 = vmatpush1.bf16.msra.mxu0 0
    %169 = vmatprep.subr.bf16.mxu0 0
    %170 = vmatpush1.bf16.msra.mxu0 0
    %171 = vmatprep.subr.bf16.mxu0 0
    %172 = vmatpush1.bf16.msra.mxu0 0
    %173 = vmatprep.subr.bf16.mxu0 0
    %174 = vmatpush1.bf16.msra.mxu0 0
    %175 = vmatprep.subr.bf16.mxu0 0
    %176 = vmatpush1.bf16.msra.mxu0 0
    %177 = vmatprep.mubr.bf16.mxu0 0
    %178 = vmatmul.mubr.bf16.gmra.mrb[0].mxu0 %v143
    %v179 = vpop.f32.mrb[0].mxu0
    %v180 = vadd.f32 %v139, %v179
    %v181 = vpop.f32.mrb[0].mxu0
    %v182 = vpop.f32.mrb[0].mxu0
    %v183 = vadd.f32 %v139, %v182
    %v184 = vpop.f32.mrb[0].mxu0
    %185 = vdwg.mxu0
    %v186 = vmax.f32 %v180, 0.0
    %v187 = vmax.f32 %v183, 0.0
    %v188 = vpack.c.bf16 %v187, %v186
    %v189 = vld [vmem:[%s5] sm:$0xff]
    %v190 = vld [vmem:[%s5 + $0x8] sm:$0xff]
    %v191 = vld [vmem:[%s5 + $0x10] sm:$0xff]
    %v192 = vld [vmem:[%s5 + $0x18] sm:$0xff]
    %v193 = vld [vmem:[%s5 + $0x20] sm:$0xff]
    %v194 = vld [vmem:[%s5 + $0x28] sm:$0xff]
    %v195 = vld [vmem:[%s5 + $0x30] sm:$0xff]
    %v196 = vld [vmem:[%s5 + $0x38] sm:$0xff]
    %v197 = vpack.c.bf16 %v190, %v189
    %v198 = vpack.c.bf16 %v192, %v191
    %v199 = vpack.c.bf16 %v194, %v193
    %v200 = vpack.c.bf16 %v196, %v195
    %v201 = vld [vmem:[%s6] sm:$0x1]
    %v203 = vlaneseq
    %v204 = vshrl.u32 %v203, 7
    %v205 = vsub.s32 0, %v204
    %v206 = vrot.slane %v201, %v205
    %v209 = vsel %vm141, %v188, 0
    %211 = vmatprep.subr.bf16.mxu0 0
    %212 = vmatpush1.bf16.msra.mxu0 %v197
    %213 = vmatprep.subr.bf16.mxu0 0
    %214 = vmatpush1.bf16.msra.mxu0 %v198
    %215 = vmatprep.subr.bf16.mxu0 0
    %216 = vmatpush1.bf16.msra.mxu0 %v199
    %217 = vmatprep.subr.bf16.mxu0 0
    %218 = vmatpush1.bf16.msra.mxu0 %v200
    %219 = vmatprep.subr.bf16.mxu0 0
    %220 = vmatpush1.bf16.msra.mxu0 0
    %221 = vmatprep.subr.bf16.mxu0 0
    %222 = vmatpush1.bf16.msra.mxu0 0
    %223 = vmatprep.subr.bf16.mxu0 0
    %224 = vmatpush1.bf16.msra.mxu0 0
    %225 = vmatprep.subr.bf16.mxu0 0
    %226 = vmatpush1.bf16.msra.mxu0 0
    %227 = vmatprep.subr.bf16.mxu0 0
    %228 = vmatpush1.bf16.msra.mxu0 0
    %229 = vmatprep.subr.bf16.mxu0 0
    %230 = vmatpush1.bf16.msra.mxu0 0
    %231 = vmatprep.subr.bf16.mxu0 0
    %232 = vmatpush1.bf16.msra.mxu0 0
    %233 = vmatprep.subr.bf16.mxu0 0
    %234 = vmatpush1.bf16.msra.mxu0 0
    %235 = vmatprep.subr.bf16.mxu0 0
    %236 = vmatpush1.bf16.msra.mxu0 0
    %237 = vmatprep.subr.bf16.mxu0 0
    %238 = vmatpush1.bf16.msra.mxu0 0
    %239 = vmatprep.subr.bf16.mxu0 0
    %240 = vmatpush1.bf16.msra.mxu0 0
    %241 = vmatprep.subr.bf16.mxu0 0
    %242 = vmatpush1.bf16.msra.mxu0 0
    %243 = vmatprep.mubr.bf16.mxu0 0
    %244 = vmatmul.mubr.bf16.gmra.mrb[0].mxu0 %v209
    %v245 = vpop.f32.mrb[0].mxu0
    %v246 = vadd.f32 %v206, %v245
    %v247 = vpop.f32.mrb[0].mxu0
    %v248 = vpop.f32.mrb[0].mxu0
    %v249 = vadd.f32 %v206, %v248
    %v250 = vpop.f32.mrb[0].mxu0
    %251 = vdwg.mxu0
    %v252 = vmul.f32 %v246, 0.5
    %v253 = vmul.f32 %v249, 0.5
    %v254 = vtanh.pop %v252
    %v255 = vtanh.pop %v253
    %v256 = vadd.f32 %v254, 1.0
    %v257 = vadd.f32 %v255, 1.0
    %v258 = vmul.f32 %v256, 0.5
    %v259 = vmul.f32 %v257, 0.5
    %vm260 = vcmask 23552
    %261 = vst.msk [vmem:[%s7] sm:$0xff] %vm260, %v258
    %262 = vst.msk [vmem:[%s7 + $0x8] sm:$0xff] %vm260, %v259
    // Predicated region
    $region38: #{tpu_custom_call.1} parent=1 // pred_check
      _
    $region39: #{tpu_custom_call.1} parent=1 // pred_check_branch
      %264 = sbr.rel (0) target = $region41
    $region40: #{tpu_custom_call.1} parent=1 // pred_region
      _
    $region41: #{tpu_custom_call.1} parent=1 // pred_fallthru
      _
    // Predicated region
    $region42: #{tpu_custom_call.1} parent=1 // pred_check
      _
    $region43: #{tpu_custom_call.1} parent=1 // pred_check_branch
      %266 = sbr.rel (0) target = $region45
    $region44: #{tpu_custom_call.1} parent=1 // pred_region
      _
    $region45: #{tpu_custom_call.1} parent=1 // pred_fallthru
      _
    %267 = vsyncpa [#allocation3], 1
    %268 = vsyncpa [#allocation5], 1

</llo_original>
